<compile_context>
chip_gen: v5e
topology: v5e:2x2
jax: 0.10.0
libtpu: 0.0.40
codegen_flags: <defaults>
</compile_context>

<pallas_src>
import jax
import jax.numpy as jnp
from jax import lax
from jax.experimental import pallas as pl
from jax.experimental.pallas import tpu as pltpu

# ----------------------------- sizes -----------------------------------------
B = 4              # serving batch
B_PAD = 8          # sublane-padded batch (unmasked vst)
F_DENSE = 16       # dense float features
VOCAB = 32         # id vocabulary per sparse key
EMB = 16           # embedding dim
HID = 32           # MLP hidden dim
N_ACT = 4          # number of actions / output scores
LANES = 128        # lane width; everything is padded to this

ID_LIST_KEYS = (1, 2)       # SUM-pooled id-list keys
ID_SCORE_LIST_KEYS = (3,)   # score-weighted SUM-pooled keys
N_SPARSE = len(ID_LIST_KEYS) + len(ID_SCORE_LIST_KEYS)
V3 = N_SPARSE * VOCAB       # stacked vocab (96); segment k at lanes [k*VOCAB, (k+1)*VOCAB)
ONES_COL = V3 + F_DENSE     # lane 112 carries the constant-1 (bias feed)

T_PAD = LANES               # padded number of sparse entries per call (lane dim)
DATA_ROWS = 24              # 8 meta rows + 8 value rows + 8 presence rows
PARAM_ROWS = 2 * LANES      # layer-1 block [0,128) + layer-2 block [128,256)

ACTION_NAMES = [f"action_{i}" for i in range(N_ACT)]


# ----------------------------- Pallas kernel ---------------------------------
def _serving_model_kernel(data_ref, param_ref, out_ref):
    """Fused serving forward pass: single invocation, two lane-dense VMEM operands.

    data_ref  : [24, 128] f32
        row 0           batch-row of each sparse entry (-1 = padding)
        row 1           pooling weight of each entry   ( 0 = padding)
        row 2           stacked id of each entry       (-1 = padding)
        rows  8..15     dense values placed at lanes [V3, V3+F_DENSE), 1.0 at lane ONES_COL
        rows 16..23     presence mask, same placement, 1.0 at lane ONES_COL
    param_ref : [256, 128] f32
        rows [0, V3)        folded sparse->hidden weights (T_k @ W1_sp_k), lane-padded
        rows [V3, V3+F)     dense->hidden weights
        row  ONES_COL       b1, plus 1.0 at lane HID (carries the bias-one into layer 2)
        rows [128, 128+HID) w2 (lane-padded), row 128+HID = b2
    out_ref   : [8, 128] f32   scores live in [:B, :N_ACT]
    """
    rows = data_ref[0:1, :]                                        # [1, T] f32
    wts = data_ref[1:2, :]                                         # [1, T]
    ids = data_ref[2:3, :].astype(jnp.int32)                       # [1, T]

    # assign[b, t] = weight_t if entry t belongs to batch row b else 0
    b_iota = lax.broadcasted_iota(jnp.int32, (B_PAD, T_PAD), 0)
    assign = jnp.where(b_iota == rows.astype(jnp.int32), wts, 0.0)  # [8, T]

    # onehot_t[v, t] = 1 if entry t carries stacked id v (built transposed:
    # ids stay lane-major, v varies along sublanes -> no relayout needed).
    v_iota = lax.broadcasted_iota(jnp.int32, (LANES, T_PAD), 0)
    onehot_t = jnp.where(v_iota == ids, 1.0, 0.0)                   # [128, T]

    # multihot[b, v] = sum_t assign[b,t] * onehot_t[v,t]  (scatter-add via MXU, A @ B^T)
    multihot = lax.dot_general(
        assign, onehot_t, (((1,), (1,)), ((), ())),
        preferred_element_type=jnp.float32)                         # [8, 128]

    # Dense preprocessing (presence masking) — values/presence are pre-placed at
    # lanes [V3, V3+F) and carry the constant-1 column, so layer 1 is one matmul.
    lhs1 = multihot + data_ref[8:16, :] * data_ref[16:24, :]        # [8, 128]

    h = jnp.maximum(
        jnp.dot(lhs1, param_ref[:LANES, :], preferred_element_type=jnp.float32),
        0.0)                                                        # [8, 128]
    out_ref[...] = jnp.dot(h, param_ref[LANES:, :],
                           preferred_element_type=jnp.float32)


# ----------------------------- glue (jitted, tiny) ----------------------------
def _rows_from_offsets(offsets, n_values):
    positions = jnp.arange(n_values)
    return jnp.searchsorted(offsets, positions, side="right") - 1


def _build_data_slab(vals, pres, id_list_features, id_score_list_features):
    """Pack all per-call inputs into one lane-dense [24, 128] f32 slab."""
    ids_parts, rows_parts, wts_parts = [], [], []

    def add(segment, offsets, ids, weights):
        rows = _rows_from_offsets(offsets, ids.shape[0])
        ids_parts.append(ids.astype(jnp.float32) + segment * VOCAB)
        # NOTE: rows carried as f32 (exact for batch < 2^24).
        rows_parts.append(rows.astype(jnp.float32))
        wts_parts.append(weights.astype(jnp.float32))

    seg = 0
    for key in ID_LIST_KEYS:
        off, ids = id_list_features[key]
        add(seg, off, ids, jnp.ones((ids.shape[0],), jnp.float32))
        seg += 1
    for key in ID_SCORE_LIST_KEYS:
        off, ids, scores = id_score_list_features[key]
        add(seg, off, ids, scores)
        seg += 1

    ids_all = jnp.concatenate(ids_parts)
    rows_all = jnp.concatenate(rows_parts)
    wts_all = jnp.concatenate(wts_parts)
    total = ids_all.shape[0]
    assert total <= T_PAD, "sparse entries exceed T_PAD; raise T_PAD"
    pad = T_PAD - total
    ids_all = jnp.pad(ids_all, (0, pad), constant_values=-1.0)
    rows_all = jnp.pad(rows_all, (0, pad), constant_values=-1.0)
    wts_all = jnp.pad(wts_all, (0, pad), constant_values=0.0)

    batch = vals.shape[0]
    x_block = jnp.zeros((B_PAD, LANES), jnp.float32)
    x_block = x_block.at[:batch, V3:V3 + F_DENSE].set(vals.astype(jnp.float32))
    x_block = x_block.at[:batch, ONES_COL].set(1.0)
    p_block = jnp.zeros((B_PAD, LANES), jnp.float32)
    p_block = p_block.at[:batch, V3:V3 + F_DENSE].set(pres.astype(jnp.float32))
    p_block = p_block.at[:batch, ONES_COL].set(1.0)

    slab = jnp.zeros((DATA_ROWS, LANES), jnp.float32)
    slab = slab.at[0].set(rows_all)
    slab = slab.at[1].set(wts_all)
    slab = slab.at[2].set(ids_all)
    slab = slab.at[8:16].set(x_block)
    slab = slab.at[16:24].set(p_block)
    return slab


def fold_params(params):
    """One-time parameter packing at model-load time.

    The table-into-W1 fold ((mh @ T) @ W == mh @ (T @ W)) is exact for SUM
    pooling; MEAN pooling would need per-row count normalization of `assign`.
    Everything is lane-padded to 128 so all in-kernel loads/matmuls are unmasked.
    """
    folded = jnp.concatenate(
        [params["t1"] @ params["w1_sp1"],
         params["t2"] @ params["w1_sp2"],
         params["ts"] @ params["w1_sps"]], axis=0)                   # [V3, HID]
    slab = jnp.zeros((PARAM_ROWS, LANES), jnp.float32)
    slab = slab.at[:V3, :HID].set(folded)
    slab = slab.at[V3:V3 + F_DENSE, :HID].set(params["w1_dense"])
    slab = slab.at[ONES_COL, :HID].set(params["b1"][0])
    slab = slab.at[ONES_COL, HID].set(1.0)      # carries constant-1 into h lane HID
    slab = slab.at[LANES:LANES + HID, :N_ACT].set(params["w2"])
    slab = slab.at[LANES + HID, :N_ACT].set(params["b2"][0])
    return slab


@jax.jit
def _forward_impl(state_with_presence, id_list_features, id_score_list_features,
                  param_slab):
    vals, pres = state_with_presence
    # TODO(synk): full ReAgent Preprocessor normalization (mean/std, boxcox,
    #             quantiles, enum one-hot) is serving-config dependent; only
    #             presence masking is implemented here.
    data = _build_data_slab(vals, pres, id_list_features, id_score_list_features)
    vmem = pl.BlockSpec(memory_space=pltpu.MemorySpace.VMEM)
    out_padded = pl.pallas_call(
        _serving_model_kernel,
        out_shape=jax.ShapeDtypeStruct((B_PAD, LANES), jnp.float32),
        in_specs=[vmem, vmem],
        out_specs=vmem,
    )(data, param_slab)
    return out_padded[:vals.shape[0], :N_ACT]


def oss_sparse_predictor_unwrapper_forward(
        state_with_presence, state_id_list_features, state_id_score_list_features,
        param_slab):
    """Returns (List[str] action_names, jnp.ndarray scores[B, N_ACT])."""
    scores = _forward_impl(state_with_presence, state_id_list_features,
                           state_id_score_list_features, param_slab)
    return ACTION_NAMES, scores


# ----------------------------- reference (unfused, plain JAX) -----------------
def _reference_forward(state_with_presence, id_list, id_score_list, params):
    vals, pres = state_with_presence
    x = vals.astype(jnp.float32) * pres.astype(jnp.float32)

    def pool(offsets, ids, table, weights):
        rows = _rows_from_offsets(offsets, ids.shape[0])
        mh = jnp.zeros((vals.shape[0], VOCAB), jnp.float32).at[rows, ids].add(weights)
        return mh @ table

    o1, i1 = id_list[ID_LIST_KEYS[0]]
    o2, i2 = id_list[ID_LIST_KEYS[1]]
    osc, isc, sc = id_score_list[ID_SCORE_LIST_KEYS[0]]
    pool1 = pool(o1, i1, params["t1"], jnp.ones_like(i1, jnp.float32))
    pool2 = pool(o2, i2, params["t2"], jnp.ones_like(i2, jnp.float32))
    pools = pool(osc, isc, params["ts"], sc.astype(jnp.float32))
    h = (x @ params["w1_dense"] + pool1 @ params["w1_sp1"]
         + pool2 @ params["w1_sp2"] + pools @ params["w1_sps"] + params["b1"])
    h = jnp.maximum(h, 0.0)
    return h @ params["w2"] + params["b2"]


# ----------------------------- deterministic params ---------------------------
def make_params(key):
    ks = jax.random.split(key, 8)
    scale = 0.1
    return {
        "t1": scale * jax.random.normal(ks[0], (VOCAB, EMB), jnp.float32),
        "t2": scale * jax.random.normal(ks[1], (VOCAB, EMB), jnp.float32),
        "ts": scale * jax.random.normal(ks[2], (VOCAB, EMB), jnp.float32),
        "w1_dense": scale * jax.random.normal(ks[3], (F_DENSE, HID), jnp.float32),
        "w1_sp1": scale * jax.random.normal(ks[4], (EMB, HID), jnp.float32),
        "w1_sp2": scale * jax.random.normal(ks[5], (EMB, HID), jnp.float32),
        "w1_sps": scale * jax.random.normal(ks[6], (EMB, HID), jnp.float32),
        "b1": jnp.zeros((1, HID), jnp.float32),
        "w2": scale * jax.random.normal(ks[7], (HID, N_ACT), jnp.float32),
        "b2": jnp.zeros((1, N_ACT), jnp.float32),
    }


# ----------------------------- main -------------------------------------------
if __name__ == "__main__":
    root = jax.random.PRNGKey(0)
    k_param, k_val, k_pres, k_i1, k_i2, k_is, k_sc = jax.random.split(root, 7)

    params = make_params(k_param)
    # Model-load-time fold (runs once, NOT in the per-call path).
    param_slab = jax.block_until_ready(fold_params(params))

    # dense float features with presence mask
    dense_vals = jax.random.normal(k_val, (B, F_DENSE), jnp.float32)
    dense_pres = (jax.random.uniform(k_pres, (B, F_DENSE)) > 0.2).astype(jnp.float32)
    state_with_presence = (dense_vals, dense_pres)

    # id-list features: key -> (offsets[B], ids[N])   (2 ids per example)
    n_ids = 2 * B
    off = jnp.arange(B, dtype=jnp.int32) * 2
    ids_a = jax.random.randint(k_i1, (n_ids,), 0, VOCAB, jnp.int32)
    ids_b = jax.random.randint(k_i2, (n_ids,), 0, VOCAB, jnp.int32)
    state_id_list_features = {1: (off, ids_a), 2: (off, ids_b)}

    # id-score-list features: key -> (offsets[B], ids[N], scores[N])
    ids_s = jax.random.randint(k_is, (n_ids,), 0, VOCAB, jnp.int32)
    scores_s = jax.random.uniform(k_sc, (n_ids,), jnp.float32)
    state_id_score_list_features = {3: (off, ids_s, scores_s)}

    action_names, q_values = oss_sparse_predictor_unwrapper_forward(
        state_with_presence,
        state_id_list_features,
        state_id_score_list_features,
        param_slab,
    )
    q_values = jax.block_until_ready(q_values)

    assert q_values.shape == (B, N_ACT) and q_values.dtype == jnp.float32
    assert len(action_names) == N_ACT

    q_ref = _reference_forward(
        state_with_presence,
        state_id_list_features,
        state_id_score_list_features,
        params,
    )
    assert jnp.allclose(q_values, q_ref, atol=1e-3, rtol=1e-3)

    print("KERNEL_OK")
</pallas_src>

<mosaic_0001>
module attributes {stable_mosaic.version = 11 : i64} {
  func.func @_serving_model_kernel(%arg0: memref<24x128xf32, #tpu.memory_space<vmem>>, %arg1: memref<256x128xf32, #tpu.memory_space<vmem>>, %arg2: memref<8x128xf32, #tpu.memory_space<vmem>>) attributes {dimension_semantics = [], scalar_prefetch = 0 : i64, scratch_operands = 0 : i64, tpu.core_type = #tpu.core_type<tc>} {
    %c0 = arith.constant 0 : index
    %c0_0 = arith.constant 0 : index
    %0 = vector.load %arg0[%c0, %c0_0] : memref<24x128xf32, #tpu.memory_space<vmem>>, vector<1x128xf32>
    %c1 = arith.constant 1 : index
    %c0_1 = arith.constant 0 : index
    %1 = vector.load %arg0[%c1, %c0_1] : memref<24x128xf32, #tpu.memory_space<vmem>>, vector<1x128xf32>
    %c2 = arith.constant 2 : index
    %c0_2 = arith.constant 0 : index
    %2 = vector.load %arg0[%c2, %c0_2] : memref<24x128xf32, #tpu.memory_space<vmem>>, vector<1x128xf32>
    %3 = arith.fptosi %2 : vector<1x128xf32> to vector<1x128xi32>
    %4 = tpu.iota {dimensions = array<i32: 0>} : vector<8x128xi32>
    %5 = arith.fptosi %0 : vector<1x128xf32> to vector<1x128xi32>
    %6 = vector.broadcast %5 : vector<1x128xi32> to vector<8x128xi32>
    %7 = arith.cmpi eq, %4, %6 : vector<8x128xi32>
    %cst = arith.constant 0.000000e+00 : f32
    %8 = vector.shape_cast %1 : vector<1x128xf32> to vector<1x128xf32>
    %9 = vector.broadcast %8 : vector<1x128xf32> to vector<8x128xf32>
    %10 = vector.broadcast %cst : f32 to vector<8x128xf32>
    %11 = arith.select %7, %9, %10 : vector<8x128xi1>, vector<8x128xf32>
    %12 = tpu.iota {dimensions = array<i32: 0>} : vector<128x128xi32>
    %13 = vector.broadcast %3 : vector<1x128xi32> to vector<128x128xi32>
    %14 = arith.cmpi eq, %12, %13 : vector<128x128xi32>
    %cst_3 = arith.constant 1.000000e+00 : f32
    %cst_4 = arith.constant 0.000000e+00 : f32
    %15 = vector.broadcast %cst_3 : f32 to vector<128x128xf32>
    %16 = vector.broadcast %cst_4 : f32 to vector<128x128xf32>
    %17 = arith.select %14, %15, %16 : vector<128x128xi1>, vector<128x128xf32>
    %cst_5 = arith.constant dense<0.000000e+00> : vector<8x128xf32>
    %18 = tpu.matmul %11, %17, %cst_5 {dimension_numbers = #tpu.dot_dimension_numbers<[1], [1], [0], [0], [0, 0, 1, 0], [], []>} : vector<8x128xf32>, vector<128x128xf32>, vector<8x128xf32> -> vector<8x128xf32>
    %c8 = arith.constant 8 : index
    %c0_6 = arith.constant 0 : index
    %19 = vector.load %arg0[%c8, %c0_6] : memref<24x128xf32, #tpu.memory_space<vmem>>, vector<8x128xf32>
    %c16 = arith.constant 16 : index
    %c0_7 = arith.constant 0 : index
    %20 = vector.load %arg0[%c16, %c0_7] : memref<24x128xf32, #tpu.memory_space<vmem>>, vector<8x128xf32>
    %21 = arith.mulf %19, %20 : vector<8x128xf32>
    %22 = arith.addf %18, %21 : vector<8x128xf32>
    %c0_8 = arith.constant 0 : index
    %c0_9 = arith.constant 0 : index
    %23 = vector.load %arg1[%c0_8, %c0_9] : memref<256x128xf32, #tpu.memory_space<vmem>>, vector<128x128xf32>
    %cst_10 = arith.constant dense<0.000000e+00> : vector<8x128xf32>
    %24 = tpu.matmul %22, %23, %cst_10 {dimension_numbers = #tpu.dot_dimension_numbers<[1], [0], [0], [1], [0, 0, 1, 1], [], []>} : vector<8x128xf32>, vector<128x128xf32>, vector<8x128xf32> -> vector<8x128xf32>
    %cst_11 = arith.constant 0.000000e+00 : f32
    %25 = vector.broadcast %cst_11 : f32 to vector<8x128xf32>
    %26 = arith.maximumf %24, %25 : vector<8x128xf32>
    %c128 = arith.constant 128 : index
    %c0_12 = arith.constant 0 : index
    %27 = vector.load %arg1[%c128, %c0_12] : memref<256x128xf32, #tpu.memory_space<vmem>>, vector<128x128xf32>
    %cst_13 = arith.constant dense<0.000000e+00> : vector<8x128xf32>
    %28 = tpu.matmul %26, %27, %cst_13 {dimension_numbers = #tpu.dot_dimension_numbers<[1], [0], [0], [1], [0, 0, 1, 1], [], []>} : vector<8x128xf32>, vector<128x128xf32>, vector<8x128xf32> -> vector<8x128xf32>
    %c0_14 = arith.constant 0 : index
    %c0_15 = arith.constant 0 : index
    %29 = vector.load %arg2[%c0_14, %c0_15] : memref<8x128xf32, #tpu.memory_space<vmem>>, vector<8x128xf32>
    tpu.vector_store %arg2[%c0_14, %c0_15], %28 {strides = array<i32>} : memref<8x128xf32, #tpu.memory_space<vmem>>, vector<8x128xf32>,
    return
  }
}

</mosaic_0001>

<llo_original>
// kernel: custom-call.4
$region0: #{custom-call.4}
  %s0 = inlined_call_operand.vmem [shape: u32[8], index: 0, kind: output, shape index: {}]

// kernel: _forward_impl.1
$region0: #{_forward_impl.1}
  #allocation0 [shape = 'u32[]', space=smem, size = 0x4, offset = 0x4, fixed_abs, tag = 'smem constant byte address 0x4 - core index']
  #allocation1 [shape = 'u32[72,128]{1,0:T(1,128)}', space=vmem, size = 0x9000, scoped, tag = 'internal scratch']
  %s0 = inlined_call_operand.vmem [shape: f32[24,128], index: 0, kind: input, shape index: {}]
  %s1 = inlined_call_operand.vmem [shape: f32[256,128], index: 1, kind: input, shape index: {}]
  %s2 = inlined_call_operand.vmem [shape: f32[8,128], index: 2, kind: output, shape index: {}]
  %s3 = sld [smem:[#allocation0]]
  $region18: #{_forward_impl.1} parent=0
    _
  %s5 = ssub.s32 1, %s3
  %s6 = scalar_select 0, %s5, %s3
  // Predicated region
  $region2: #{_forward_impl.1} parent=0 // pred_check
    _
  $region3: #{_forward_impl.1} parent=0 // pred_check_branch
    %8 = sbr.rel (0) target = $region5
  $region4: #{_forward_impl.1} parent=0 // pred_region
    _
  $region5: #{_forward_impl.1} parent=0 // pred_fallthru
    _
  // Predicated region
  $region6: #{_forward_impl.1} parent=0 // pred_check
    _
  $region7: #{_forward_impl.1} parent=0 // pred_check_branch
    %10 = sbr.rel (0) target = $region9
  $region8: #{_forward_impl.1} parent=0 // pred_region
    _
  $region9: #{_forward_impl.1} parent=0 // pred_fallthru
    _
  %v11 = vld [vmem:[%s0] sm:$0x1]
  %v12 = vld [vmem:[%s0 + $0x1] sm:$0x1]
  %v13 = vld [vmem:[%s0 + $0x2] sm:$0x1]
  %v14 = vcvt.f32.s32.to.zero.pseudo %v13
  %v15 = vlaneseq
  %v16 = vshrl.u32 %v15, 7
  %v17 = vcvt.f32.s32.to.zero.pseudo %v11
  %v18 = vperm.slane %v17, 0
  %vm19 = vcmp.eq.s32.totalorder %v16, %v18
  %v20 = vperm.slane %v12, 0
  %v21 = vsel %vm19, %v20, 0.0
  %v22 = vadd.s32 %v16, 8
  %v23 = vadd.s32 %v16, 16
  %v24 = vadd.s32 %v16, 24
  %v25 = vadd.s32 %v16, 32
  %v26 = vadd.s32 %v16, 40
  %v27 = vadd.s32 %v16, 48
  %v28 = vadd.s32 %v16, 56
  %v29 = vadd.s32 %v16, 64
  %v30 = vadd.s32 %v16, 72
  %v31 = vadd.s32 %v16, 80
  %v32 = vadd.s32 %v16, 88
  %v33 = vadd.s32 %v16, 96
  %v34 = vadd.s32 %v16, 104
  %v35 = vadd.s32 %v16, 112
  %v36 = vadd.s32 %v16, 120
  %v37 = vperm.slane %v14, 0
  %vm38 = vcmp.eq.s32.totalorder %v16, %v37
  %vm39 = vcmp.eq.s32.totalorder %v22, %v37
  %vm40 = vcmp.eq.s32.totalorder %v23, %v37
  %vm41 = vcmp.eq.s32.totalorder %v24, %v37
  %vm42 = vcmp.eq.s32.totalorder %v25, %v37
  %vm43 = vcmp.eq.s32.totalorder %v26, %v37
  %vm44 = vcmp.eq.s32.totalorder %v27, %v37
  %vm45 = vcmp.eq.s32.totalorder %v28, %v37
  %vm46 = vcmp.eq.s32.totalorder %v29, %v37
  %vm47 = vcmp.eq.s32.totalorder %v30, %v37
  %vm48 = vcmp.eq.s32.totalorder %v31, %v37
  %vm49 = vcmp.eq.s32.totalorder %v32, %v37
  %vm50 = vcmp.eq.s32.totalorder %v33, %v37
  %vm51 = vcmp.eq.s32.totalorder %v34, %v37
  %vm52 = vcmp.eq.s32.totalorder %v35, %v37
  %vm53 = vcmp.eq.s32.totalorder %v36, %v37
  %v54 = vsel %vm38, 1.0, 0.0
  %v55 = vsel %vm39, 1.0, 0.0
  %v56 = vsel %vm40, 1.0, 0.0
  %v57 = vsel %vm41, 1.0, 0.0
  %v58 = vsel %vm42, 1.0, 0.0
  %v59 = vsel %vm43, 1.0, 0.0
  %v60 = vsel %vm44, 1.0, 0.0
  %v61 = vsel %vm45, 1.0, 0.0
  %v62 = vsel %vm46, 1.0, 0.0
  %v63 = vsel %vm47, 1.0, 0.0
  %v64 = vsel %vm48, 1.0, 0.0
  %v65 = vsel %vm49, 1.0, 0.0
  %v66 = vsel %vm50, 1.0, 0.0
  %v67 = vsel %vm51, 1.0, 0.0
  %v68 = vsel %vm52, 1.0, 0.0
  %v69 = vsel %vm53, 1.0, 0.0
  %v70 = vld [vmem:[%s0 + $0x8] sm:$0xff]
  %v71 = vld [vmem:[%s0 + $0x10] sm:$0xff]
  %v72 = vmul.f32 %v70, %v71
  %73 = vmatpush.xpose.msra.mxu0 %v69
  %74 = vmatpush.xpose.msra.mxu0 %v68
  %75 = vmatpush.xpose.msra.mxu0 %v67
  %76 = vmatpush.xpose.msra.mxu0 %v66
  %77 = vmatpush.xpose.msra.mxu0 %v65
  %78 = vmatpush.xpose.msra.mxu0 %v64
  %79 = vmatpush.xpose.msra.mxu0 %v63
  %80 = vmatpush.xpose.msra.mxu0 %v62
  %81 = vmatpush.xpose.msra.mxu0 %v61
  %82 = vmatpush.xpose.msra.mxu0 %v60
  %83 = vmatpush.xpose.msra.mxu0 %v59
  %84 = vmatpush.xpose.msra.mxu0 %v58
  %85 = vmatpush.xpose.msra.mxu0 %v57
  %86 = vmatpush.xpose.msra.mxu0 %v56
  %87 = vmatpush.xpose.msra.mxu0 %v55
  %88 = vmatpush.xpose.msra.mxu0 %v54
  %89 = vmatmul.f32.gmra.mxu0 %v21
  %v90 = vpop.f32.mrf.mxu0
  %v91 = vadd.f32 %v72, %v90
  %92 = vdwg.mxu0
  %v93 = vld [vmem:[%s1] sm:$0xff]
  %v94 = vld [vmem:[%s1 + $0x8] sm:$0xff]
  %v95 = vld [vmem:[%s1 + $0x10] sm:$0xff]
  %v96 = vld [vmem:[%s1 + $0x18] sm:$0xff]
  %v97 = vld [vmem:[%s1 + $0x20] sm:$0xff]
  %v98 = vld [vmem:[%s1 + $0x28] sm:$0xff]
  %v99 = vld [vmem:[%s1 + $0x30] sm:$0xff]
  %v100 = vld [vmem:[%s1 + $0x38] sm:$0xff]
  %v101 = vld [vmem:[%s1 + $0x40] sm:$0xff]
  %v102 = vld [vmem:[%s1 + $0x48] sm:$0xff]
  %v103 = vld [vmem:[%s1 + $0x50] sm:$0xff]
  %v104 = vld [vmem:[%s1 + $0x58] sm:$0xff]
  %v105 = vld [vmem:[%s1 + $0x60] sm:$0xff]
  %v106 = vld [vmem:[%s1 + $0x68] sm:$0xff]
  %v107 = vld [vmem:[%s1 + $0x70] sm:$0xff]
  %v108 = vld [vmem:[%s1 + $0x78] sm:$0xff]
  %109 = vmatpush.msra.mxu0 %v108
  %110 = vmatpush.msra.mxu0 %v107
  %111 = vmatpush.msra.mxu0 %v106
  %112 = vmatpush.msra.mxu0 %v105
  %113 = vmatpush.msra.mxu0 %v104
  %114 = vmatpush.msra.mxu0 %v103
  %115 = vmatpush.msra.mxu0 %v102
  %116 = vmatpush.msra.mxu0 %v101
  %117 = vmatpush.msra.mxu0 %v100
  %118 = vmatpush.msra.mxu0 %v99
  %119 = vmatpush.msra.mxu0 %v98
  %120 = vmatpush.msra.mxu0 %v97
  %121 = vmatpush.msra.mxu0 %v96
  %122 = vmatpush.msra.mxu0 %v95
  %123 = vmatpush.msra.mxu0 %v94
  %124 = vmatpush.msra.mxu0 %v93
  %125 = vmatmul.f32.gmra.mxu0 %v91
  %v126 = vpop.f32.mrf.mxu0
  %v127 = vadd.f32 0.0, %v126
  %128 = vdwg.mxu0
  %v129 = vmax.f32 %v127, 0.0
  %v130 = vld [vmem:[%s1 + $0x80] sm:$0xff]
  %v131 = vld [vmem:[%s1 + $0x88] sm:$0xff]
  %v132 = vld [vmem:[%s1 + $0x90] sm:$0xff]
  %v133 = vld [vmem:[%s1 + $0x98] sm:$0xff]
  %v134 = vld [vmem:[%s1 + $0xa0] sm:$0xff]
  %v135 = vld [vmem:[%s1 + $0xa8] sm:$0xff]
  %v136 = vld [vmem:[%s1 + $0xb0] sm:$0xff]
  %v137 = vld [vmem:[%s1 + $0xb8] sm:$0xff]
  %v138 = vld [vmem:[%s1 + $0xc0] sm:$0xff]
  %v139 = vld [vmem:[%s1 + $0xc8] sm:$0xff]
  %v140 = vld [vmem:[%s1 + $0xd0] sm:$0xff]
  %v141 = vld [vmem:[%s1 + $0xd8] sm:$0xff]
  %v142 = vld [vmem:[%s1 + $0xe0] sm:$0xff]
  %v143 = vld [vmem:[%s1 + $0xe8] sm:$0xff]
  %v144 = vld [vmem:[%s1 + $0xf0] sm:$0xff]
  %v145 = vld [vmem:[%s1 + $0xf8] sm:$0xff]
  %146 = vmatpush.msra.mxu0 %v145
  %147 = vmatpush.msra.mxu0 %v144
  %148 = vmatpush.msra.mxu0 %v143
  %149 = vmatpush.msra.mxu0 %v142
  %150 = vmatpush.msra.mxu0 %v141
  %151 = vmatpush.msra.mxu0 %v140
  %152 = vmatpush.msra.mxu0 %v139
  %153 = vmatpush.msra.mxu0 %v138
  %154 = vmatpush.msra.mxu0 %v137
  %155 = vmatpush.msra.mxu0 %v136
  %156 = vmatpush.msra.mxu0 %v135
  %157 = vmatpush.msra.mxu0 %v134
  %158 = vmatpush.msra.mxu0 %v133
  %159 = vmatpush.msra.mxu0 %v132
  %160 = vmatpush.msra.mxu0 %v131
  %161 = vmatpush.msra.mxu0 %v130
  %162 = vmatmul.f32.gmra.mxu0 %v129
  %v163 = vpop.f32.mrf.mxu0
  %v164 = vadd.f32 0.0, %v163
  %165 = vdwg.mxu0
  %166 = vst [vmem:[%s2] sm:$0xff] %v164
  // Predicated region
  $region10: #{_forward_impl.1} parent=0 // pred_check
    _
  $region11: #{_forward_impl.1} parent=0 // pred_check_branch
    %168 = sbr.rel (0) target = $region13
  $region12: #{_forward_impl.1} parent=0 // pred_region
    _
  $region13: #{_forward_impl.1} parent=0 // pred_fallthru
    _
  // Predicated region
  $region14: #{_forward_impl.1} parent=0 // pred_check
    _
  $region15: #{_forward_impl.1} parent=0 // pred_check_branch
    %170 = sbr.rel (0) target = $region17
  $region16: #{_forward_impl.1} parent=0 // pred_region
    _
  $region17: #{_forward_impl.1} parent=0 // pred_fallthru
    _

</llo_original>
